<compile_context>
chip_gen: v7x
topology: tpu7x:2x2x1
jax: 0.10.0
libtpu: 0.0.40
codegen_flags: <defaults>
</compile_context>

<pallas_src>
import math

import jax
import jax.numpy as jnp
from jax.experimental import pallas as pl
from jax.experimental.pallas import tpu as pltpu


def time_attn_kernel(out_ref, kq_ref, bias_ref, o_ref):
    # out_ref : (Bb, Sp, Dp) bf16/f32 -- the only large HBM stream.
    # kq_ref  : (Bb, Dp) f32, q already folded through W_k and 1/temperature.
    # bias_ref: (Bb, Sp) f32, time/position bias with -inf at pad positions.
    xf = out_ref[...].astype(jnp.float32)                    # (Bb, Sp, Dp)
    kq = kq_ref[...]                                         # (Bb, Dp)

    # scores[b, s] = <out[b, s, :], (q @ W_k)[b, :]>  (W_k matmul folded away).
    scores = jnp.sum(xf * kq[:, None, :], axis=-1) + bias_ref[...]   # (Bb, Sp)

    # Masked softmax over S with deferred normalization (scale pooled result,
    # not the (Bb, Sp) weights).  Fully padded rows give NaN like the reference.
    m = jnp.max(scores, axis=-1, keepdims=True)              # (Bb, 1)
    e = jnp.exp(scores - m)                                  # (Bb, Sp); 0 at pads
    denom = jnp.sum(e, axis=-1, keepdims=True)               # (Bb, 1)

    # Attention-weighted sum over S -> (Bb, Dp), normalized once (exact divide;
    # the kernel is HBM-bound so the EUP approx reciprocal buys nothing).
    pooled = jnp.sum(xf * e[:, :, None], axis=1)             # (Bb, Dp)
    o_ref[...] = (pooled / denom).astype(o_ref.dtype)


def _ceil_to(x, m):
    return -(-x // m) * m


def _tile_bytes(shape, dtype):
    """Lane/sublane-padded VMEM footprint of one block."""
    itemsize = jnp.dtype(dtype).itemsize
    if len(shape) == 1:
        return _ceil_to(shape[0] * itemsize, 512)
    *lead, sub, lane = shape
    n = 1
    for d in lead:
        n *= d
    sub_tile = 8 * max(1, 4 // itemsize)      # 8 for f32, 16 for bf16
    return n * _ceil_to(sub, sub_tile) * _ceil_to(lane, 128) * itemsize


def _vmem_estimate(bb, sp, dp, stream_dtype):
    """Double-buffered I/O plus the kernel's f32 full-tile temporaries."""
    io = (2 * _tile_bytes((bb, sp, dp), stream_dtype)    # out stream
          + 2 * _tile_bytes((bb, dp), jnp.float32)       # kq
          + 2 * _tile_bytes((bb, sp), jnp.float32)       # bias
          + 2 * _tile_bytes((bb, dp), jnp.float32))      # output
    tmp = 2 * _tile_bytes((bb, sp, dp), jnp.float32)     # xf cast + weighted prod
    return io + tmp


def _vmem_capacity_bytes():
    try:
        return int(pltpu.get_tpu_info().vmem_capacity_bytes)
    except Exception:
        return 64 << 20   # conservative fallback: v7x per-TensorCore VMEM


def _pick_block_b(B, sp, dp, stream_dtype, vmem_budget):
    cands = sorted({d for d in range(8, B + 1, 8) if B % d == 0} | {B},
                   reverse=True)
    # Prefer >= 2 grid steps so both v7x TensorCores get work; on v5e/v6e the
    # extra step costs ~0.35 us which is noise, so this is safe everywhere.
    multi = [d for d in cands if d <= B // 2] or cands
    for d in multi:
        if _vmem_estimate(d, sp, dp, stream_dtype) <= vmem_budget:
            return d
    return multi[-1]


def time_attn_forward(out, hn, pos_ind, rel_dt, params, beta, *,
                      block_b=None, use_bf16=True):
    B, S, D = out.shape
    temperature = math.sqrt(float(D))

    # ---- hoisted glue (plain XLA): q, W_k fold, time/position bias, mask.
    q = (hn @ params["W_q"].T) * jnp.float32(1.0 / temperature)      # (B, D)
    # <out @ W_k^T, q> == <out, q @ W_k>  ->  fold W_k into q (exact).
    kq = (q @ params["W_k"]).astype(jnp.float32)                     # (B, D)
    pos_e = jnp.take(params["pos_emb"], pos_ind, axis=0)             # (B, S, T)
    rel_e = jnp.take(params["rel_emb"], rel_dt, axis=0)              # (B, S, T)
    cat = jnp.concatenate([rel_e, pos_e], axis=-1)                   # (B, S, 2T)
    bias = beta * jnp.squeeze(cat @ params["W_rp"].T, -1)            # (B, S)
    bias = jnp.where(pos_ind == 0, -jnp.inf, bias).astype(jnp.float32)

    # ---- layout padding: D -> multiple of 128 (lane-dense), S -> multiple of
    # ---- 8 (sublane).  Padded S positions get bias = -inf, so they are exact
    # ---- no-ops; padded D columns multiply by kq = 0 and are sliced off.
    Dp = _ceil_to(D, 128)
    Sp = _ceil_to(S, 8)
    stream_dtype = jnp.bfloat16 if use_bf16 else jnp.float32
    out_p = jnp.pad(out.astype(stream_dtype),
                    ((0, 0), (0, Sp - S), (0, Dp - D)))
    kq_p = jnp.pad(kq, ((0, 0), (0, Dp - D)))
    bias_p = jnp.pad(bias, ((0, 0), (0, Sp - S)), constant_values=-jnp.inf)

    # ---- batch blocking sized from the per-generation VMEM budget.
    vmem_cap = _vmem_capacity_bytes()
    vmem_budget = int(0.8 * vmem_cap)        # ~51 MiB v7x, ~102 MiB v5e/v6e
    if block_b is None:
        block_b = _pick_block_b(B, Sp, Dp, stream_dtype, vmem_budget)
    assert B % block_b == 0, "block_b must divide B"
    assert block_b == B or block_b % 8 == 0, \
        "block_b must be B or a multiple of 8 (sublane constraint)"
    grid = (B // block_b,)

    vmem_est = _vmem_estimate(block_b, Sp, Dp, stream_dtype)
    vmem_limit = int(min(max(int(1.25 * vmem_est), 16 << 20), vmem_budget))

    pooled = pl.pallas_call(
        time_attn_kernel,
        out_shape=jax.ShapeDtypeStruct((B, Dp), jnp.float32),
        grid_spec=pltpu.PrefetchScalarGridSpec(
            num_scalar_prefetch=0,
            grid=grid,
            in_specs=[
                pl.BlockSpec((block_b, Sp, Dp), lambda b: (b, 0, 0)),  # out
                pl.BlockSpec((block_b, Dp), lambda b: (b, 0)),         # q@W_k/temp
                pl.BlockSpec((block_b, Sp), lambda b: (b, 0)),         # bias+mask
            ],
            out_specs=pl.BlockSpec((block_b, Dp), lambda b: (b, 0)),
        ),
        compiler_params=pltpu.CompilerParams(
            dimension_semantics=("parallel",),
            vmem_limit_bytes=vmem_limit),
    )(out_p, kq_p, bias_p)

    return pooled[:, :D]


def time_attn_reference(out, hn, pos_ind, rel_dt, params, beta):
    """Pure-JAX reference mirroring the PyTorch forward."""
    D = out.shape[-1]
    temperature = math.sqrt(float(D))
    pad_mask = pos_ind == 0
    pos_e = jnp.take(params["pos_emb"], pos_ind, axis=0)
    rel_e = jnp.take(params["rel_emb"], rel_dt, axis=0)
    attn_k = out @ params["W_k"].T
    attn_q = hn @ params["W_q"].T
    attn_0 = jnp.einsum("bsd,bd->bs", attn_k, attn_q) / temperature
    attn_1 = jnp.squeeze(
        jnp.concatenate([rel_e, pos_e], -1) @ params["W_rp"].T, -1)
    attn = attn_0 + beta * attn_1
    attn = jnp.where(pad_mask, -jnp.inf, attn)
    attn = jax.nn.softmax(attn, axis=1)
    return jnp.einsum("bs,bsd->bd", attn, out)


def init_params(key, dim, time_dim):
    ks = jax.random.split(key, 5)
    u = lambda k, shape: jax.random.uniform(k, shape, jnp.float32, -0.1, 0.1)
    return {
        "pos_emb": u(ks[0], (150, time_dim)),
        "rel_emb": u(ks[1], (150, time_dim)),
        "W_k": u(ks[2], (dim, dim)),       # nn.Linear(dim, dim, bias=False)
        "W_q": u(ks[3], (dim, dim)),
        "W_rp": u(ks[4], (1, 2 * time_dim)),
        # self.rate is a Parameter but unused in forward; abs_dt is also unused.
    }


if __name__ == "__main__":
    # Small but representative: B=16 gives a 2-step parallel grid (block_b=8),
    # S=9 exercises the sublane padding (-> 16), D=32 the lane padding (-> 128).
    B, S, D, T = 16, 9, 32, 16
    beta = 0.5

    key = jax.random.PRNGKey(0)
    k_p, k_out, k_hn, k_pos, k_rel = jax.random.split(key, 5)

    params = init_params(k_p, D, T)

    out = jax.random.normal(k_out, (B, S, D), jnp.float32)
    hn = jax.random.normal(k_hn, (B, D), jnp.float32)
    pos_ind = jax.random.randint(k_pos, (B, S), 1, 150, jnp.int32)
    pos_ind = pos_ind.at[:, -2:].set(0)   # trailing pad positions (index 0 = pad)
    rel_dt = jax.random.randint(k_rel, (B, S), 0, 150, jnp.int32)

    y_ref = time_attn_reference(out, hn, pos_ind, rel_dt, params, beta)

    # f32 streaming path (tight tolerance; only f32 reassociation differs).
    y32 = time_attn_forward(out, hn, pos_ind, rel_dt, params, beta,
                            use_bf16=False)
    y32 = jax.block_until_ready(y32)
    assert y32.shape == (B, D)
    err32 = jnp.max(jnp.abs(y32 - y_ref))
    assert jnp.allclose(y32, y_ref, atol=2e-3, rtol=2e-3), (
        f"f32 max abs err {err32}")

    # Default path: bf16 `out` stream, f32 accumulation (dominant HBM traffic
    # halved; error bounded by bf16 rounding of `out`).
    y16 = time_attn_forward(out, hn, pos_ind, rel_dt, params, beta)
    y16 = jax.block_until_ready(y16)
    err16 = jnp.max(jnp.abs(y16 - y_ref))
    assert jnp.allclose(y16, y_ref, atol=5e-2, rtol=5e-2), (
        f"bf16 max abs err {err16}")

    print("KERNEL_OK")
</pallas_src>

<mosaic_0001>
module attributes {stable_mosaic.version = 11 : i64} {
  func.func @time_attn_kernel(%arg0: i32, %arg1: memref<8x16x128xf32, #tpu.memory_space<vmem>>, %arg2: memref<8x128xf32, #tpu.memory_space<vmem>>, %arg3: memref<8x16xf32, #tpu.memory_space<vmem>>, %arg4: memref<8x128xf32, #tpu.memory_space<vmem>>) attributes {dimension_semantics = [#tpu.dimension_semantics<parallel>], iteration_bounds = array<i64: 2>, scalar_prefetch = 0 : i64, scratch_operands = 0 : i64, tpu.core_type = #tpu.core_type<tc>, window_params = [{transform_indices = @transform_0, window_bounds = array<i64: 8, 16, 128>}, {transform_indices = @transform_1, window_bounds = array<i64: 8, 128>}, {transform_indices = @transform_2, window_bounds = array<i64: 8, 16>}, {transform_indices = @transform_3, window_bounds = array<i64: 8, 128>}]} {
    %c0 = arith.constant 0 : index
    %c0_0 = arith.constant 0 : index
    %c0_1 = arith.constant 0 : index
    %0 = vector.load %arg1[%c0, %c0_0, %c0_1] : memref<8x16x128xf32, #tpu.memory_space<vmem>>, vector<8x16x128xf32>
    %c0_2 = arith.constant 0 : index
    %c0_3 = arith.constant 0 : index
    %1 = vector.load %arg2[%c0_2, %c0_3] : memref<8x128xf32, #tpu.memory_space<vmem>>, vector<8x128xf32>
    %2 = vector.shape_cast %1 : vector<8x128xf32> to vector<8x1x128xf32>
    %3 = vector.broadcast %2 : vector<8x1x128xf32> to vector<8x16x128xf32>
    %4 = arith.mulf %0, %3 : vector<8x16x128xf32>
    %cst = arith.constant dense<0.000000e+00> : vector<8x16xf32>
    %5 = vector.multi_reduction <add>, %4, %cst [2] : vector<8x16x128xf32> to vector<8x16xf32>
    %c0_4 = arith.constant 0 : index
    %c0_5 = arith.constant 0 : index
    %6 = vector.load %arg3[%c0_4, %c0_5] : memref<8x16xf32, #tpu.memory_space<vmem>>, vector<8x16xf32>
    %7 = arith.addf %5, %6 : vector<8x16xf32>
    %cst_6 = arith.constant dense<0xFF800000> : vector<8xf32>
    %8 = vector.multi_reduction <maximumf>, %7, %cst_6 [1] : vector<8x16xf32> to vector<8xf32>
    %9 = vector.shape_cast %8 : vector<8xf32> to vector<8x1xf32>
    %10 = vector.broadcast %9 : vector<8x1xf32> to vector<8x16xf32>
    %11 = arith.subf %7, %10 : vector<8x16xf32>
    %12 = math.exp %11 : vector<8x16xf32>
    %cst_7 = arith.constant dense<0.000000e+00> : vector<8xf32>
    %13 = vector.multi_reduction <add>, %12, %cst_7 [1] : vector<8x16xf32> to vector<8xf32>
    %14 = vector.shape_cast %13 : vector<8xf32> to vector<8x1xf32>
    %15 = vector.shape_cast %12 : vector<8x16xf32> to vector<8x16x1xf32>
    %16 = vector.broadcast %15 : vector<8x16x1xf32> to vector<8x16x128xf32>
    %17 = arith.mulf %0, %16 : vector<8x16x128xf32>
    %cst_8 = arith.constant dense<0.000000e+00> : vector<8x128xf32>
    %18 = vector.multi_reduction <add>, %17, %cst_8 [1] : vector<8x16x128xf32> to vector<8x128xf32>
    %19 = vector.broadcast %14 : vector<8x1xf32> to vector<8x128xf32>
    %20 = arith.divf %18, %19 : vector<8x128xf32>
    %c0_9 = arith.constant 0 : index
    %c0_10 = arith.constant 0 : index
    %21 = vector.load %arg4[%c0_9, %c0_10] : memref<8x128xf32, #tpu.memory_space<vmem>>, vector<8x128xf32>
    tpu.vector_store %arg4[%c0_9, %c0_10], %20 {strides = array<i32>} : memref<8x128xf32, #tpu.memory_space<vmem>>, vector<8x128xf32>,
    return
  }
  func.func @transform_0(%arg0: i32) -> (i32, i32, i32) {
    %c0_i32 = arith.constant 0 : i32
    %c0_i32_0 = arith.constant 0 : i32
    %c0_i32_1 = arith.constant 0 : i32
    return %arg0, %c0_i32, %c0_i32_0 : i32, i32, i32
  }
  func.func @transform_1(%arg0: i32) -> (i32, i32) {
    %c0_i32 = arith.constant 0 : i32
    %c0_i32_0 = arith.constant 0 : i32
    return %arg0, %c0_i32 : i32, i32
  }
  func.func @transform_2(%arg0: i32) -> (i32, i32) {
    %c0_i32 = arith.constant 0 : i32
    %c0_i32_0 = arith.constant 0 : i32
    return %arg0, %c0_i32 : i32, i32
  }
  func.func @transform_3(%arg0: i32) -> (i32, i32) {
    %c0_i32 = arith.constant 0 : i32
    %c0_i32_0 = arith.constant 0 : i32
    return %arg0, %c0_i32 : i32, i32
  }
}

</mosaic_0001>

<llo_original>
// kernel: tpu_custom_call.1
$region0: #{tpu_custom_call.1}
  #allocation0 [shape = 'u32[]', space=smem, size = 0x4, offset = 0x4, fixed_abs, tag = 'smem constant byte address 0x4 - core index']
  #allocation1 [shape = 'u32[144,128]{1,0:T(1,128)}', space=vmem, size = 0x12000, scoped, tag = 'internal scratch']
  %s0 = inlined_call_operand.hbm [shape: f32[16,16,128], index: 0, kind: input, shape index: {}]
  %s1 = inlined_call_operand.hbm [shape: f32[16,128], index: 1, kind: input, shape index: {}]
  %s2 = inlined_call_operand.hbm [shape: f32[16,16], index: 2, kind: input, shape index: {}]
  %s3 = inlined_call_operand.hbm [shape: f32[16,128], index: 3, kind: output, shape index: {}]
  %s4 = sld [smem:[#allocation0]]
  $region57: #{tpu_custom_call.1} parent=0
    _
  %s6 = ssub.s32 1, %s4
  %s7 = scalar_select 0, %s6, %s4
  $region1: #{tpu_custom_call.1} parent=0
    #allocation2 [shape = 'u8[131072]{0}', space=vmem, size = 0x20000, scoped, tag = 'input window, operand 0']
    #allocation3 [shape = 's32[2]{0}', space=sflag, size = 0x8, scoped, tag = 'scoped memory for tpu_custom_call.1']
    #allocation4 [shape = 's32[2]{0}', space=sflag, size = 0x8, scoped, tag = 'scoped memory for tpu_custom_call.1']
    #allocation5 [shape = 'u8[8192]{0}', space=vmem, size = 0x2000, scoped, tag = 'input window, operand 1']
    #allocation6 [shape = 's32[2]{0}', space=sflag, size = 0x8, scoped, tag = 'scoped memory for tpu_custom_call.1']
    #allocation7 [shape = 'u8[8192]{0}', space=vmem, size = 0x2000, scoped, tag = 'input window, operand 2']
    #allocation8 [shape = 'u8[8192]{0}', space=vmem, size = 0x2000, scoped, tag = 'output window, operand 0']
    %8 = vsyncpa [#allocation3], 0
    %s9 = scalar_lea.sflag [#allocation3], 1
    %10 = vsyncpa %s9, 0
    %11 = vsyncpa [#allocation6], 0
    %s12 = scalar_lea.sflag [#allocation6], 1
    %13 = vsyncpa %s12, 0
    %14 = vsyncpa [#allocation4], 0
    %s15 = scalar_lea.sflag [#allocation4], 1
    %16 = vsyncpa %s15, 0
    loop: start=0, step=1, limit=4
    $region2: #{tpu_custom_call.1} parent=1 // loop_pre_header
      _
    $region3: #{tpu_custom_call.1} parent=1 // loop_header
      %s18 = sphi 0, %s22
      %p19 = scmp.ge.s32.totalorder %s18, 4
      %s28 = sphi 0, %s30
      %s31 = sphi 0, %s28
      %s32 = sphi 0, %s31
      %s48 = sphi 0, %s32
      %s54 = sphi 0, %s56
      %s57 = sphi 0, %s54
      %s58 = sphi 0, %s57
      %s74 = sphi 0, %s58
      %s80 = sphi 0, %s82
      %s83 = sphi 0, %s80
      %s84 = sphi 0, %s83
      %s100 = sphi 0, %s84
      %s106 = sphi 0, %s108
      %s109 = sphi 0, %s106
      %s110 = sphi 0, %s109
      %s126 = sphi 0, %s110
    $region4: #{tpu_custom_call.1} parent=1 // loop_header_branch
      %21 = sbr.rel (%p19) target = $region8
    $region5: #{tpu_custom_call.1} parent=1 // loop_body
      %s23 = ssub.s32 %s18, 1
      %s24 = ssub.s32 %s18, 2
      %s25 = sadd.s32 %s18, 1
      %s26 = ssub.s32 %s18, %s25
      %p27 = scmp.eq.s32.totalorder %s26, 0
      %s29 = sadd.s32 %s28, 1
      %s30 = scalar_select %p27, %s28, %s29
      %p33 = pneg %p27
      %p34 = scmp.eq.s32.totalorder %s18, 1
      %p35 = por %p33, %p34
      %p36 = scmp.ne.s32.totalorder %s28, %s31
      %p37 = scmp.eq.s32.totalorder %s18, 0
      %p38 = por %p36, %p37
      %p39 = scmp.ne.s32.totalorder %s28, %s31
      %p40 = scmp.eq.s32.totalorder %s23, 1
      %p41 = por %p39, %p40
      %p42 = scmp.ne.s32.totalorder %s31, %s32
      %p43 = scmp.eq.s32.totalorder %s23, 0
      %p44 = por %p42, %p43
      %p45 = scmp.ne.s32.totalorder %s31, %s32
      %p46 = scmp.eq.s32.totalorder %s24, 1
      %p47 = por %p45, %p46
      %p49 = scmp.ne.s32.totalorder %s32, %s48
      %p50 = scmp.eq.s32.totalorder %s24, 0
      %p51 = por %p49, %p50
      %s52 = ssub.s32 %s18, %s25
      %p53 = scmp.eq.s32.totalorder %s52, 0
      %s55 = sadd.s32 %s54, 1
      %s56 = scalar_select %p53, %s54, %s55
      %p59 = pneg %p53
      %p60 = scmp.eq.s32.totalorder %s18, 1
      %p61 = por %p59, %p60
      %p62 = scmp.ne.s32.totalorder %s54, %s57
      %p63 = scmp.eq.s32.totalorder %s18, 0
      %p64 = por %p62, %p63
      %p65 = scmp.ne.s32.totalorder %s54, %s57
      %p66 = scmp.eq.s32.totalorder %s23, 1
      %p67 = por %p65, %p66
      %p68 = scmp.ne.s32.totalorder %s57, %s58
      %p69 = scmp.eq.s32.totalorder %s23, 0
      %p70 = por %p68, %p69
      %p71 = scmp.ne.s32.totalorder %s57, %s58
      %p72 = scmp.eq.s32.totalorder %s24, 1
      %p73 = por %p71, %p72
      %p75 = scmp.ne.s32.totalorder %s58, %s74
      %p76 = scmp.eq.s32.totalorder %s24, 0
      %p77 = por %p75, %p76
      %s78 = ssub.s32 %s18, %s25
      %p79 = scmp.eq.s32.totalorder %s78, 0
      %s81 = sadd.s32 %s80, 1
      %s82 = scalar_select %p79, %s80, %s81
      %p85 = pneg %p79
      %p86 = scmp.eq.s32.totalorder %s18, 1
      %p87 = por %p85, %p86
      %p88 = scmp.ne.s32.totalorder %s80, %s83
      %p89 = scmp.eq.s32.totalorder %s18, 0
      %p90 = por %p88, %p89
      %p91 = scmp.ne.s32.totalorder %s80, %s83
      %p92 = scmp.eq.s32.totalorder %s23, 1
      %p93 = por %p91, %p92
      %p94 = scmp.ne.s32.totalorder %s83, %s84
      %p95 = scmp.eq.s32.totalorder %s23, 0
      %p96 = por %p94, %p95
      %p97 = scmp.ne.s32.totalorder %s83, %s84
      %p98 = scmp.eq.s32.totalorder %s24, 1
      %p99 = por %p97, %p98
      %p101 = scmp.ne.s32.totalorder %s84, %s100
      %p102 = scmp.eq.s32.totalorder %s24, 0
      %p103 = por %p101, %p102
      %s104 = ssub.s32 %s18, %s25
      %p105 = scmp.eq.s32.totalorder %s104, 0
      %s107 = sadd.s32 %s106, 1
      %s108 = scalar_select %p105, %s106, %s107
      %p111 = pneg %p105
      %p112 = scmp.eq.s32.totalorder %s18, 1
      %p113 = por %p111, %p112
      %p114 = scmp.ne.s32.totalorder %s106, %s109
      %p115 = scmp.eq.s32.totalorder %s18, 0
      %p116 = por %p114, %p115
      %p117 = scmp.ne.s32.totalorder %s106, %s109
      %p118 = scmp.eq.s32.totalorder %s23, 1
      %p119 = por %p117, %p118
      %p120 = scmp.ne.s32.totalorder %s109, %s110
      %p121 = scmp.eq.s32.totalorder %s23, 0
      %p122 = por %p120, %p121
      %p123 = scmp.ne.s32.totalorder %s109, %s110
      %p124 = scmp.eq.s32.totalorder %s24, 1
      %p125 = por %p123, %p124
      %p127 = scmp.ne.s32.totalorder %s110, %s126
      %p128 = scmp.eq.s32.totalorder %s24, 0
      %p129 = por %p127, %p128
      %p130 = scmp.le.s32.totalorder 1, %s18
      %p131 = scmp.lt.s32.totalorder %s18, 3
      %p132 = pnand %p130, %p131
      %p133 = pneg %p132
      // Predicated region
      $region9: #{tpu_custom_call.1} parent=5 // pred_check
        _
      $region10: #{tpu_custom_call.1} parent=5 // pred_check_branch
        %135 = sbr.rel (%p132) target = $region12
      $region11: #{tpu_custom_call.1} parent=5 // pred_region
        %s136 = ssub.s32 %s18, 1
      $region12: #{tpu_custom_call.1} parent=5 // pred_fallthru
        _
      %p137 = scmp.lt.s32.totalorder %s18, 2
      // Predicated region
      $region13: #{tpu_custom_call.1} parent=5 // pred_check
        %p138 = pneg %p137
      $region14: #{tpu_custom_call.1} parent=5 // pred_check_branch
        %140 = sbr.rel (%p138) target = $region16
      $region15: #{tpu_custom_call.1} parent=5 // pred_region
        // Predicated region
        $region17: #{tpu_custom_call.1} parent=15 // pred_check
          %p141 = pneg %p38
        $region18: #{tpu_custom_call.1} parent=15 // pred_check_branch
          %143 = sbr.rel (%p141) target = $region20
        $region19: #{tpu_custom_call.1} parent=15 // pred_region
          %s144 = sand.u32 %s28, 1
          %s145 = scalar_lea.sflag [#allocation3], %s144
          %s146 = sand.u32 %s28, 1
          %s147 = smul.addr %s146, 128
          %s148 = scalar_lea.vmem [#allocation2], %s147
          %s149 = smul.u32 8, %s18
          %s151 = ssub.s32 2048, 2048
          %152 = vsyncadd %s145, %s151
          %s153 = smul.addr %s149, 2
          %s154 = smul.addr %s153, 128
          %s155 = scalar_lea.hbm %s0, %s154
          %s156 = sshll.u32 %s148, 4
          %s157 = int_to_ptr.vmem [resolvable:$true] %s156
          %162 = dma.hbm_to_vmem [thread:$0]  %s155, 2048, %s157, %s145, 128, 128, 8
        $region20: #{tpu_custom_call.1} parent=15 // pred_fallthru
          _
        // Predicated region
        $region21: #{tpu_custom_call.1} parent=15 // pred_check
          %p163 = pneg %p64
        $region22: #{tpu_custom_call.1} parent=15 // pred_check_branch
          %165 = sbr.rel (%p163) target = $region24
        $region23: #{tpu_custom_call.1} parent=15 // pred_region
          %s166 = sand.u32 %s18, 1
          %s167 = scalar_lea.sflag [#allocation6], %s166
          %s168 = sand.u32 %s54, 1
          %s169 = smul.addr %s168, 8
          %s170 = scalar_lea.vmem [#allocation5], %s169
          %s172 = ssub.s32 128, 128
          %173 = vsyncadd %s167, %s172
          %s174 = smul.addr %s18, 128
          %s175 = scalar_lea.hbm %s1, %s174
          %s177 = sshll.u32 %s170, 4
          %s178 = int_to_ptr.vmem [resolvable:$true] %s177
          %180 = dma.hbm_to_vmem [thread:$0]  %s175, 128, %s178, %s167
        $region24: #{tpu_custom_call.1} parent=15 // pred_fallthru
          _
        // Predicated region
        $region25: #{tpu_custom_call.1} parent=15 // pred_check
          %p181 = pneg %p90
        $region26: #{tpu_custom_call.1} parent=15 // pred_check_branch
          %183 = sbr.rel (%p181) target = $region28
        $region27: #{tpu_custom_call.1} parent=15 // pred_region
          %s184 = sand.u32 %s18, 1
          %s185 = scalar_lea.sflag [#allocation6], %s184
          %s186 = sand.u32 %s80, 1
          %s187 = smul.addr %s186, 8
          %s188 = scalar_lea.vmem [#allocation7], %s187
          %s190 = ssub.s32 128, 128
          %191 = vsyncadd %s185, %s190
          %s192 = smul.addr %s18, 128
          %s193 = scalar_lea.hbm %s2, %s192
          %s195 = sshll.u32 %s188, 4
          %s196 = int_to_ptr.vmem [resolvable:$true] %s195
          %198 = dma.hbm_to_vmem [thread:$0]  %s193, 128, %s196, %s185
        $region28: #{tpu_custom_call.1} parent=15 // pred_fallthru
          _
      $region16: #{tpu_custom_call.1} parent=5 // pred_fallthru
        _
      %p199 = scmp.le.s32.totalorder 1, %s18
      %p200 = scmp.lt.s32.totalorder %s18, 3
      %p201 = pnand %p199, %p200
      %p202 = pneg %p201
      // Predicated region
      $region29: #{tpu_custom_call.1} parent=5 // pred_check
        _
      $region30: #{tpu_custom_call.1} parent=5 // pred_check_branch
        %204 = sbr.rel (%p201) target = $region32
      $region31: #{tpu_custom_call.1} parent=5 // pred_region
        %s205 = ssub.s32 %s18, 1
        %s206 = sand.u32 %s31, 1
        %s207 = scalar_lea.sflag [#allocation3], %s206
        %s208 = sand.u32 %s31, 1
        %s209 = smul.addr %s208, 128
        %s210 = scalar_lea.vmem [#allocation2], %s209
        // Predicated region
        $region33: #{tpu_custom_call.1} parent=31 // pred_check
          %p211 = pneg %p44
        $region34: #{tpu_custom_call.1} parent=31 // pred_check_branch
          %213 = sbr.rel (%p211) target = $region36
        $region35: #{tpu_custom_call.1} parent=31 // pred_region
          %214 = dma.done %s207, 2048
        $region36: #{tpu_custom_call.1} parent=31 // pred_fallthru
          _
        %s215 = sand.u32 %s23, 1
        %s216 = scalar_lea.sflag [#allocation6], %s215
        %s217 = sand.u32 %s57, 1
        %s218 = smul.addr %s217, 8
        %s219 = scalar_lea.vmem [#allocation5], %s218
        // Predicated region
        $region37: #{tpu_custom_call.1} parent=31 // pred_check
          %p220 = pneg %p70
        $region38: #{tpu_custom_call.1} parent=31 // pred_check_branch
          %222 = sbr.rel (%p220) target = $region40
        $region39: #{tpu_custom_call.1} parent=31 // pred_region
          %223 = dma.done %s216, 128
        $region40: #{tpu_custom_call.1} parent=31 // pred_fallthru
          _
        %s224 = sand.u32 %s23, 1
        %s225 = scalar_lea.sflag [#allocation6], %s224
        %s226 = sand.u32 %s83, 1
        %s227 = smul.addr %s226, 8
        %s228 = scalar_lea.vmem [#allocation7], %s227
        // Predicated region
        $region41: #{tpu_custom_call.1} parent=31 // pred_check
          %p229 = pneg %p96
        $region42: #{tpu_custom_call.1} parent=31 // pred_check_branch
          %231 = sbr.rel (%p229) target = $region44
        $region43: #{tpu_custom_call.1} parent=31 // pred_region
          %232 = dma.done %s225, 128
        $region44: #{tpu_custom_call.1} parent=31 // pred_fallthru
          _
        %s233 = sand.u32 %s31, 1
        %s234 = scalar_lea.sflag [#allocation3], %s233
        %s235 = sand.u32 %s31, 1
        %s236 = smul.addr %s235, 128
        %s237 = scalar_lea.vmem [#allocation2], %s236
        %p238 = pneg %p44
        %p239 = pneg %p41
        %s240 = sand.u32 %s23, 1
        %s241 = scalar_lea.sflag [#allocation6], %s240
        %s242 = sand.u32 %s57, 1
        %s243 = smul.addr %s242, 8
        %s244 = scalar_lea.vmem [#allocation5], %s243
        %p245 = pneg %p70
        %p246 = pneg %p67
        %s247 = sand.u32 %s23, 1
        %s248 = scalar_lea.sflag [#allocation6], %s247
        %s249 = sand.u32 %s83, 1
        %s250 = smul.addr %s249, 8
        %s251 = scalar_lea.vmem [#allocation7], %s250
        %p252 = pneg %p96
        %p253 = pneg %p93
        %p254 = pneg %p122
        %p255 = pneg %p119
        %s256 = sand.u32 %s109, 1
        %s257 = scalar_lea.sflag [#allocation4], %s256
        %s258 = sand.u32 %s109, 1
        %s259 = smul.addr %s258, 8
        %s260 = scalar_lea.vmem [#allocation8], %s259
        %s261 = smul.u32 8, %s23
        %v262 = vld [vmem:[%s210] sm:$0xff]
        %v263 = vld [vmem:[%s210 + $0x8] sm:$0xff]
        %v264 = vld [vmem:[%s210 + $0x10] sm:$0xff]
        %v265 = vld [vmem:[%s210 + $0x18] sm:$0xff]
        %v266 = vld [vmem:[%s210 + $0x20] sm:$0xff]
        %v267 = vld [vmem:[%s210 + $0x28] sm:$0xff]
        %v268 = vld [vmem:[%s210 + $0x30] sm:$0xff]
        %v269 = vld [vmem:[%s210 + $0x38] sm:$0xff]
        %v270 = vld [vmem:[%s210 + $0x40] sm:$0xff]
        %v271 = vld [vmem:[%s210 + $0x48] sm:$0xff]
        %v272 = vld [vmem:[%s210 + $0x50] sm:$0xff]
        %v273 = vld [vmem:[%s210 + $0x58] sm:$0xff]
        %v274 = vld [vmem:[%s210 + $0x60] sm:$0xff]
        %v275 = vld [vmem:[%s210 + $0x68] sm:$0xff]
        %v276 = vld [vmem:[%s210 + $0x70] sm:$0xff]
        %v277 = vld [vmem:[%s210 + $0x78] sm:$0xff]
        %v278 = vld [vmem:[%s219] sm:$0xff]
        %v280 = vcombine.high %v278, %v278
        %v282 = vunpack.c.l.s4 1966171168
        %v283 = vunpack.c.0.s8 %v282
        %v284 = vlaneseq
        %v285 = vshrl.u32 %v284, 7
        %v286 = vsub.s32 %v283, %v285
        %v287 = vrot.slane %v278, %v286
        %v289 = vunpack.c.l.s4 1966171168
        %v290 = vunpack.c.0.s8 %v289
        %v291 = vlaneseq
        %v292 = vshrl.u32 %v291, 7
        %v293 = vsub.s32 %v290, %v292
        %v294 = vrot.slane %v280, %v293
        %v295 = vcombine.high %v287, %v287
        %v296 = vcombine.high %v294, %v294
        %v298 = vunpack.c.l.s4 1966171168
        %v299 = vunpack.c.0.s8 %v298
        %v300 = vlaneseq
        %v301 = vshrl.u32 %v300, 7
        %v302 = vsub.s32 %v299, %v301
        %v303 = vrot.slane %v287, %v302
        %v305 = vunpack.c.l.s4 1966171168
        %v306 = vunpack.c.0.s8 %v305
        %v307 = vlaneseq
        %v308 = vshrl.u32 %v307, 7
        %v309 = vsub.s32 %v306, %v308
        %v310 = vrot.slane %v294, %v309
        %v312 = vunpack.c.l.s4 1966171168
        %v313 = vunpack.c.0.s8 %v312
        %v314 = vlaneseq
        %v315 = vshrl.u32 %v314, 7
        %v316 = vsub.s32 %v313, %v315
        %v317 = vrot.slane %v295, %v316
        %v319 = vunpack.c.l.s4 1966171168
        %v320 = vunpack.c.0.s8 %v319
        %v321 = vlaneseq
        %v322 = vshrl.u32 %v321, 7
        %v323 = vsub.s32 %v320, %v322
        %v324 = vrot.slane %v296, %v323
        %v325 = vcombine.high %v303, %v303
        %v326 = vcombine.high %v310, %v310
        %v327 = vcombine.high %v317, %v317
        %v328 = vcombine.high %v324, %v324
        %v329 = vlaneseq
        %v330 = vshrl.u32 %v329, 7
        %v331 = vsub.s32 0, %v330
        %v332 = vrot.slane %v303, %v331
        %v333 = vlaneseq
        %v334 = vshrl.u32 %v333, 7
        %v335 = vsub.s32 0, %v334
        %v336 = vrot.slane %v317, %v335
        %v337 = vlaneseq
        %v338 = vshrl.u32 %v337, 7
        %v339 = vsub.s32 0, %v338
        %v340 = vrot.slane %v325, %v339
        %v341 = vlaneseq
        %v342 = vshrl.u32 %v341, 7
        %v343 = vsub.s32 0, %v342
        %v344 = vrot.slane %v327, %v343
        %v345 = vlaneseq
        %v346 = vshrl.u32 %v345, 7
        %v347 = vsub.s32 0, %v346
        %v348 = vrot.slane %v310, %v347
        %v349 = vlaneseq
        %v350 = vshrl.u32 %v349, 7
        %v351 = vsub.s32 0, %v350
        %v352 = vrot.slane %v324, %v351
        %v353 = vlaneseq
        %v354 = vshrl.u32 %v353, 7
        %v355 = vsub.s32 0, %v354
        %v356 = vrot.slane %v326, %v355
        %v357 = vlaneseq
        %v358 = vshrl.u32 %v357, 7
        %v359 = vsub.s32 0, %v358
        %v360 = vrot.slane %v328, %v359
        %v369 = vmul.f32 %v262, %v332
        %v370 = vmul.f32 %v263, %v332
        %v371 = vmul.f32 %v264, %v336
        %v372 = vmul.f32 %v265, %v336
        %v373 = vmul.f32 %v266, %v340
        %v374 = vmul.f32 %v267, %v340
        %v375 = vmul.f32 %v268, %v344
        %v376 = vmul.f32 %v269, %v344
        %v377 = vmul.f32 %v270, %v348
        %v378 = vmul.f32 %v271, %v348
        %v379 = vmul.f32 %v272, %v352
        %v380 = vmul.f32 %v273, %v352
        %v381 = vmul.f32 %v274, %v356
        %v382 = vmul.f32 %v275, %v356
        %v383 = vmul.f32 %v276, %v360
        %v384 = vmul.f32 %v277, %v360
        %385 = vadd.xlane.f32.xlu0 %v369
        %v386 = vpop.xlane.xlu0 %385
        %387 = vadd.xlane.f32.xlu0 %v370
        %v388 = vpop.xlane.xlu0 %387
        %389 = vadd.xlane.f32.xlu0 %v371
        %v390 = vpop.xlane.xlu0 %389
        %391 = vadd.xlane.f32.xlu0 %v372
        %v392 = vpop.xlane.xlu0 %391
        %393 = vadd.xlane.f32.xlu0 %v373
        %v394 = vpop.xlane.xlu0 %393
        %395 = vadd.xlane.f32.xlu0 %v374
        %v396 = vpop.xlane.xlu0 %395
        %397 = vadd.xlane.f32.xlu0 %v375
        %v398 = vpop.xlane.xlu0 %397
        %399 = vadd.xlane.f32.xlu0 %v376
        %v400 = vpop.xlane.xlu0 %399
        %401 = vadd.xlane.f32.xlu0 %v377
        %v402 = vpop.xlane.xlu0 %401
        %403 = vadd.xlane.f32.xlu0 %v378
        %v404 = vpop.xlane.xlu0 %403
        %405 = vadd.xlane.f32.xlu0 %v379
        %v406 = vpop.xlane.xlu0 %405
        %407 = vadd.xlane.f32.xlu0 %v380
        %v408 = vpop.xlane.xlu0 %407
        %409 = vadd.xlane.f32.xlu0 %v381
        %v410 = vpop.xlane.xlu0 %409
        %411 = vadd.xlane.f32.xlu0 %v382
        %v412 = vpop.xlane.xlu0 %411
        %413 = vadd.xlane.f32.xlu0 %v383
        %v414 = vpop.xlane.xlu0 %413
        %415 = vadd.xlane.f32.xlu0 %v384
        %v416 = vpop.xlane.xlu0 %415
        %v417 = vld [vmem:[%s228] sm:$0xff]
        %v419 = vlaneseq
        %v420 = vshrl.u32 %v419, 7
        %v421 = vsub.s32 0, %v420
        %v422 = vrot.slane %v417, %v421
        %424 = vbcast.lane.b32.xlu0 %v422, 256
        %v425 = vpop.permute.xlu0 %424
        %s427 = sor.u32 256, 8
        %428 = vbcast.lane.b32.xlu0 %v422, %s427
        %v429 = vpop.permute.xlu0 %428
        %v430 = vlaneseq
        %v431 = vshrl.u32 %v430, 7
        %v432 = vsub.s32 1, %v431
        %v433 = vrot.slane %v417, %v432
        %435 = vbcast.lane.b32.xlu0 %v433, 256
        %v436 = vpop.permute.xlu0 %435
        %s438 = sor.u32 256, 8
        %439 = vbcast.lane.b32.xlu0 %v433, %s438
        %v440 = vpop.permute.xlu0 %439
        %v441 = vlaneseq
        %v442 = vshrl.u32 %v441, 7
        %v443 = vsub.s32 2, %v442
        %v444 = vrot.slane %v417, %v443
        %446 = vbcast.lane.b32.xlu0 %v444, 256
        %v447 = vpop.permute.xlu0 %446
        %s449 = sor.u32 256, 8
        %450 = vbcast.lane.b32.xlu0 %v444, %s449
        %v451 = vpop.permute.xlu0 %450
        %v452 = vlaneseq
        %v453 = vshrl.u32 %v452, 7
        %v454 = vsub.s32 3, %v453
        %v455 = vrot.slane %v417, %v454
        %457 = vbcast.lane.b32.xlu0 %v455, 256
        %v458 = vpop.permute.xlu0 %457
        %s460 = sor.u32 256, 8
        %461 = vbcast.lane.b32.xlu0 %v455, %s460
        %v462 = vpop.permute.xlu0 %461
        %v463 = vlaneseq
        %v464 = vshrl.u32 %v463, 7
        %v465 = vsub.s32 4, %v464
        %v466 = vrot.slane %v417, %v465
        %468 = vbcast.lane.b32.xlu0 %v466, 256
        %v469 = vpop.permute.xlu0 %468
        %s471 = sor.u32 256, 8
        %472 = vbcast.lane.b32.xlu0 %v466, %s471
        %v473 = vpop.permute.xlu0 %472
        %v474 = vlaneseq
        %v475 = vshrl.u32 %v474, 7
        %v476 = vsub.s32 5, %v475
        %v477 = vrot.slane %v417, %v476
        %479 = vbcast.lane.b32.xlu0 %v477, 256
        %v480 = vpop.permute.xlu0 %479
        %s482 = sor.u32 256, 8
        %483 = vbcast.lane.b32.xlu0 %v477, %s482
        %v484 = vpop.permute.xlu0 %483
        %v485 = vlaneseq
        %v486 = vshrl.u32 %v485, 7
        %v487 = vsub.s32 6, %v486
        %v488 = vrot.slane %v417, %v487
        %490 = vbcast.lane.b32.xlu0 %v488, 256
        %v491 = vpop.permute.xlu0 %490
        %s493 = sor.u32 256, 8
        %494 = vbcast.lane.b32.xlu0 %v488, %s493
        %v495 = vpop.permute.xlu0 %494
        %v496 = vlaneseq
        %v497 = vshrl.u32 %v496, 7
        %v498 = vsub.s32 7, %v497
        %v499 = vrot.slane %v417, %v498
        %501 = vbcast.lane.b32.xlu0 %v499, 256
        %v502 = vpop.permute.xlu0 %501
        %s504 = sor.u32 256, 8
        %505 = vbcast.lane.b32.xlu0 %v499, %s504
        %v506 = vpop.permute.xlu0 %505
        %v523 = vadd.f32 %v386, %v425
        %v524 = vadd.f32 %v388, %v429
        %v525 = vadd.f32 %v390, %v436
        %v526 = vadd.f32 %v392, %v440
        %v527 = vadd.f32 %v394, %v447
        %v528 = vadd.f32 %v396, %v451
        %v529 = vadd.f32 %v398, %v458
        %v530 = vadd.f32 %v400, %v462
        %v531 = vadd.f32 %v402, %v469
        %v532 = vadd.f32 %v404, %v473
        %v533 = vadd.f32 %v406, %v480
        %v534 = vadd.f32 %v408, %v484
        %v535 = vadd.f32 %v410, %v491
        %v536 = vadd.f32 %v412, %v495
        %v537 = vadd.f32 %v414, %v502
        %v538 = vadd.f32 %v416, %v506
        %555 = vset.pattern.permute.xlu0 0
        %556 = vperm.xlu0 %555, %v523
        %v557 = vpop.permute.xlu0 %556
        %558 = vset.pattern.permute.xlu0 0
        %559 = vperm.xlu0 %558, %v524
        %v560 = vpop.permute.xlu0 %559
        %561 = vset.pattern.permute.xlu0 0
        %562 = vperm.xlu0 %561, %v525
        %v563 = vpop.permute.xlu0 %562
        %564 = vset.pattern.permute.xlu0 0
        %565 = vperm.xlu0 %564, %v526
        %v566 = vpop.permute.xlu0 %565
        %567 = vset.pattern.permute.xlu0 0
        %568 = vperm.xlu0 %567, %v527
        %v569 = vpop.permute.xlu0 %568
        %570 = vset.pattern.permute.xlu0 0
        %571 = vperm.xlu0 %570, %v528
        %v572 = vpop.permute.xlu0 %571
        %573 = vset.pattern.permute.xlu0 0
        %574 = vperm.xlu0 %573, %v529
        %v575 = vpop.permute.xlu0 %574
        %576 = vset.pattern.permute.xlu0 0
        %577 = vperm.xlu0 %576, %v530
        %v578 = vpop.permute.xlu0 %577
        %579 = vset.pattern.permute.xlu0 0
        %580 = vperm.xlu0 %579, %v531
        %v581 = vpop.permute.xlu0 %580
        %582 = vset.pattern.permute.xlu0 0
        %583 = vperm.xlu0 %582, %v532
        %v584 = vpop.permute.xlu0 %583
        %585 = vset.pattern.permute.xlu0 0
        %586 = vperm.xlu0 %585, %v533
        %v587 = vpop.permute.xlu0 %586
        %588 = vset.pattern.permute.xlu0 0
        %589 = vperm.xlu0 %588, %v534
        %v590 = vpop.permute.xlu0 %589
        %591 = vset.pattern.permute.xlu0 0
        %592 = vperm.xlu0 %591, %v535
        %v593 = vpop.permute.xlu0 %592
        %594 = vset.pattern.permute.xlu0 0
        %595 = vperm.xlu0 %594, %v536
        %v596 = vpop.permute.xlu0 %595
        %597 = vset.pattern.permute.xlu0 0
        %598 = vperm.xlu0 %597, %v537
        %v599 = vpop.permute.xlu0 %598
        %600 = vset.pattern.permute.xlu0 0
        %601 = vperm.xlu0 %600, %v538
        %v602 = vpop.permute.xlu0 %601
        %v603 = vlaneseq
        %v604 = vand.u32 %v603, 127
        %v605 = vlaneseq
        %v606 = vshrl.u32 %v605, 7
        %v607 = vsub.s32 %v604, %v606
        %v608 = vrot.slane %v557, %v607
        %v609 = vadd.s32 %v604, 4294967288
        %v610 = vlaneseq
        %v611 = vshrl.u32 %v610, 7
        %v612 = vsub.s32 %v609, %v611
        %v613 = vrot.slane %v560, %v612
        %vm614 = vcmask 130112
        %v615 = vsel %vm614, %v613, %v608
        %v616 = vlaneseq
        %v617 = vshrl.u32 %v616, 7
        %v618 = vsub.s32 %v604, %v617
        %v619 = vrot.slane %v563, %v618
        %v620 = vlaneseq
        %v621 = vshrl.u32 %v620, 7
        %v622 = vsub.s32 %v609, %v621
        %v623 = vrot.slane %v566, %v622
        %v624 = vsel %vm614, %v623, %v619
        %v625 = vlaneseq
        %v626 = vshrl.u32 %v625, 7
        %v627 = vsub.s32 %v604, %v626
        %v628 = vrot.slane %v569, %v627
        %v629 = vlaneseq
        %v630 = vshrl.u32 %v629, 7
        %v631 = vsub.s32 %v609, %v630
        %v632 = vrot.slane %v572, %v631
        %v633 = vsel %vm614, %v632, %v628
        %v634 = vlaneseq
        %v635 = vshrl.u32 %v634, 7
        %v636 = vsub.s32 %v604, %v635
        %v637 = vrot.slane %v575, %v636
        %v638 = vlaneseq
        %v639 = vshrl.u32 %v638, 7
        %v640 = vsub.s32 %v609, %v639
        %v641 = vrot.slane %v578, %v640
        %v642 = vsel %vm614, %v641, %v637
        %v643 = vlaneseq
        %v644 = vshrl.u32 %v643, 7
        %v645 = vsub.s32 %v604, %v644
        %v646 = vrot.slane %v581, %v645
        %v647 = vlaneseq
        %v648 = vshrl.u32 %v647, 7
        %v649 = vsub.s32 %v609, %v648
        %v650 = vrot.slane %v584, %v649
        %v651 = vsel %vm614, %v650, %v646
        %v652 = vlaneseq
        %v653 = vshrl.u32 %v652, 7
        %v654 = vsub.s32 %v604, %v653
        %v655 = vrot.slane %v587, %v654
        %v656 = vlaneseq
        %v657 = vshrl.u32 %v656, 7
        %v658 = vsub.s32 %v609, %v657
        %v659 = vrot.slane %v590, %v658
        %v660 = vsel %vm614, %v659, %v655
        %v661 = vlaneseq
        %v662 = vshrl.u32 %v661, 7
        %v663 = vsub.s32 %v604, %v662
        %v664 = vrot.slane %v593, %v663
        %v665 = vlaneseq
        %v666 = vshrl.u32 %v665, 7
        %v667 = vsub.s32 %v609, %v666
        %v668 = vrot.slane %v596, %v667
        %v669 = vsel %vm614, %v668, %v664
        %v670 = vlaneseq
        %v671 = vshrl.u32 %v670, 7
        %v672 = vsub.s32 %v604, %v671
        %v673 = vrot.slane %v599, %v672
        %v674 = vlaneseq
        %v675 = vshrl.u32 %v674, 7
        %v676 = vsub.s32 %v609, %v675
        %v677 = vrot.slane %v602, %v676
        %v678 = vsel %vm614, %v677, %v673
        %vm679 = vcmask 1041409
        %v680 = vsel %vm679, %v624, %v615
        %vm681 = vcmask 1042434
        %v682 = vsel %vm681, %v633, %v680
        %vm683 = vcmask 1043459
        %v684 = vsel %vm683, %v642, %v682
        %vm685 = vcmask 1044484
        %v686 = vsel %vm685, %v651, %v684
        %vm687 = vcmask 1045509
        %v688 = vsel %vm687, %v660, %v686
        %vm689 = vcmask 1046534
        %v690 = vsel %vm689, %v669, %v688
        %vm691 = vcmask 1047559
        %v692 = vsel %vm691, %v678, %v690
        %vm694 = vcmask 130048
        %v695 = vsel %vm694, %v692, -inf
        %696 = vmax.xlane.f32.xlu0 %v695
        %v697 = vpop.xlane.xlu0 %696
        %v699 = vlaneseq
        %v700 = vshrl.u32 %v699, 7
        %v701 = vsub.s32 0, %v700
        %v702 = vrot.slane %v697, %v701
        %v703 = vlaneseq
        %v704 = vshrl.u32 %v703, 7
        %v705 = vsub.s32 1, %v704
        %v706 = vrot.slane %v697, %v705
        %v707 = vlaneseq
        %v708 = vshrl.u32 %v707, 7
        %v709 = vsub.s32 2, %v708
        %v710 = vrot.slane %v697, %v709
        %v711 = vlaneseq
        %v712 = vshrl.u32 %v711, 7
        %v713 = vsub.s32 3, %v712
        %v714 = vrot.slane %v697, %v713
        %v715 = vlaneseq
        %v716 = vshrl.u32 %v715, 7
        %v717 = vsub.s32 4, %v716
        %v718 = vrot.slane %v697, %v717
        %v719 = vlaneseq
        %v720 = vshrl.u32 %v719, 7
        %v721 = vsub.s32 5, %v720
        %v722 = vrot.slane %v697, %v721
        %v723 = vlaneseq
        %v724 = vshrl.u32 %v723, 7
        %v725 = vsub.s32 6, %v724
        %v726 = vrot.slane %v697, %v725
        %v727 = vlaneseq
        %v728 = vshrl.u32 %v727, 7
        %v729 = vsub.s32 7, %v728
        %v730 = vrot.slane %v697, %v729
        %v739 = vsub.f32 %v523, %v702
        %v740 = vsub.f32 %v524, %v702
        %v741 = vsub.f32 %v525, %v706
        %v742 = vsub.f32 %v526, %v706
        %v743 = vsub.f32 %v527, %v710
        %v744 = vsub.f32 %v528, %v710
        %v745 = vsub.f32 %v529, %v714
        %v746 = vsub.f32 %v530, %v714
        %v747 = vsub.f32 %v531, %v718
        %v748 = vsub.f32 %v532, %v718
        %v749 = vsub.f32 %v533, %v722
        %v750 = vsub.f32 %v534, %v722
        %v751 = vsub.f32 %v535, %v726
        %v752 = vsub.f32 %v536, %v726
        %v753 = vsub.f32 %v537, %v730
        %v754 = vsub.f32 %v538, %v730
        %v755 = vmul.f32 %v739, 1.442695
        %v756 = vpow.pop %v755
        %v757 = vmul.f32 %v740, 1.442695
        %v758 = vpow.pop %v757
        %v759 = vmul.f32 %v741, 1.442695
        %v760 = vpow.pop %v759
        %v761 = vmul.f32 %v742, 1.442695
        %v762 = vpow.pop %v761
        %v763 = vmul.f32 %v743, 1.442695
        %v764 = vpow.pop %v763
        %v765 = vmul.f32 %v744, 1.442695
        %v766 = vpow.pop %v765
        %v767 = vmul.f32 %v745, 1.442695
        %v768 = vpow.pop %v767
        %v769 = vmul.f32 %v746, 1.442695
        %v770 = vpow.pop %v769
        %v771 = vmul.f32 %v747, 1.442695
        %v772 = vpow.pop %v771
        %v773 = vmul.f32 %v748, 1.442695
        %v774 = vpow.pop %v773
        %v775 = vmul.f32 %v749, 1.442695
        %v776 = vpow.pop %v775
        %v777 = vmul.f32 %v750, 1.442695
        %v778 = vpow.pop %v777
        %v779 = vmul.f32 %v751, 1.442695
        %v780 = vpow.pop %v779
        %v781 = vmul.f32 %v752, 1.442695
        %v782 = vpow.pop %v781
        %v783 = vmul.f32 %v753, 1.442695
        %v784 = vpow.pop %v783
        %v785 = vmul.f32 %v754, 1.442695
        %v786 = vpow.pop %v785
        %803 = vset.pattern.permute.xlu0 0
        %804 = vperm.xlu0 %803, %v756
        %v805 = vpop.permute.xlu0 %804
        %806 = vset.pattern.permute.xlu0 0
        %807 = vperm.xlu0 %806, %v758
        %v808 = vpop.permute.xlu0 %807
        %809 = vset.pattern.permute.xlu0 0
        %810 = vperm.xlu0 %809, %v760
        %v811 = vpop.permute.xlu0 %810
        %812 = vset.pattern.permute.xlu0 0
        %813 = vperm.xlu0 %812, %v762
        %v814 = vpop.permute.xlu0 %813
        %815 = vset.pattern.permute.xlu0 0
        %816 = vperm.xlu0 %815, %v764
        %v817 = vpop.permute.xlu0 %816
        %818 = vset.pattern.permute.xlu0 0
        %819 = vperm.xlu0 %818, %v766
        %v820 = vpop.permute.xlu0 %819
        %821 = vset.pattern.permute.xlu0 0
        %822 = vperm.xlu0 %821, %v768
        %v823 = vpop.permute.xlu0 %822
        %824 = vset.pattern.permute.xlu0 0
        %825 = vperm.xlu0 %824, %v770
        %v826 = vpop.permute.xlu0 %825
        %827 = vset.pattern.permute.xlu0 0
        %828 = vperm.xlu0 %827, %v772
        %v829 = vpop.permute.xlu0 %828
        %830 = vset.pattern.permute.xlu0 0
        %831 = vperm.xlu0 %830, %v774
        %v832 = vpop.permute.xlu0 %831
        %833 = vset.pattern.permute.xlu0 0
        %834 = vperm.xlu0 %833, %v776
        %v835 = vpop.permute.xlu0 %834
        %836 = vset.pattern.permute.xlu0 0
        %837 = vperm.xlu0 %836, %v778
        %v838 = vpop.permute.xlu0 %837
        %839 = vset.pattern.permute.xlu0 0
        %840 = vperm.xlu0 %839, %v780
        %v841 = vpop.permute.xlu0 %840
        %842 = vset.pattern.permute.xlu0 0
        %843 = vperm.xlu0 %842, %v782
        %v844 = vpop.permute.xlu0 %843
        %845 = vset.pattern.permute.xlu0 0
        %846 = vperm.xlu0 %845, %v784
        %v847 = vpop.permute.xlu0 %846
        %848 = vset.pattern.permute.xlu0 0
        %849 = vperm.xlu0 %848, %v786
        %v850 = vpop.permute.xlu0 %849
        %v851 = vlaneseq
        %v852 = vshrl.u32 %v851, 7
        %v853 = vsub.s32 %v604, %v852
        %v854 = vrot.slane %v805, %v853
        %v855 = vlaneseq
        %v856 = vshrl.u32 %v855, 7
        %v857 = vsub.s32 %v609, %v856
        %v858 = vrot.slane %v808, %v857
        %v859 = vsel %vm614, %v858, %v854
        %v860 = vlaneseq
        %v861 = vshrl.u32 %v860, 7
        %v862 = vsub.s32 %v604, %v861
        %v863 = vrot.slane %v811, %v862
        %v864 = vlaneseq
        %v865 = vshrl.u32 %v864, 7
        %v866 = vsub.s32 %v609, %v865
        %v867 = vrot.slane %v814, %v866
        %v868 = vsel %vm614, %v867, %v863
        %v869 = vlaneseq
        %v870 = vshrl.u32 %v869, 7
        %v871 = vsub.s32 %v604, %v870
        %v872 = vrot.slane %v817, %v871
        %v873 = vlaneseq
        %v874 = vshrl.u32 %v873, 7
        %v875 = vsub.s32 %v609, %v874
        %v876 = vrot.slane %v820, %v875
        %v877 = vsel %vm614, %v876, %v872
        %v878 = vlaneseq
        %v879 = vshrl.u32 %v878, 7
        %v880 = vsub.s32 %v604, %v879
        %v881 = vrot.slane %v823, %v880
        %v882 = vlaneseq
        %v883 = vshrl.u32 %v882, 7
        %v884 = vsub.s32 %v609, %v883
        %v885 = vrot.slane %v826, %v884
        %v886 = vsel %vm614, %v885, %v881
        %v887 = vlaneseq
        %v888 = vshrl.u32 %v887, 7
        %v889 = vsub.s32 %v604, %v888
        %v890 = vrot.slane %v829, %v889
        %v891 = vlaneseq
        %v892 = vshrl.u32 %v891, 7
        %v893 = vsub.s32 %v609, %v892
        %v894 = vrot.slane %v832, %v893
        %v895 = vsel %vm614, %v894, %v890
        %v896 = vlaneseq
        %v897 = vshrl.u32 %v896, 7
        %v898 = vsub.s32 %v604, %v897
        %v899 = vrot.slane %v835, %v898
        %v900 = vlaneseq
        %v901 = vshrl.u32 %v900, 7
        %v902 = vsub.s32 %v609, %v901
        %v903 = vrot.slane %v838, %v902
        %v904 = vsel %vm614, %v903, %v899
        %v905 = vlaneseq
        %v906 = vshrl.u32 %v905, 7
        %v907 = vsub.s32 %v604, %v906
        %v908 = vrot.slane %v841, %v907
        %v909 = vlaneseq
        %v910 = vshrl.u32 %v909, 7
        %v911 = vsub.s32 %v609, %v910
        %v912 = vrot.slane %v844, %v911
        %v913 = vsel %vm614, %v912, %v908
        %v914 = vlaneseq
        %v915 = vshrl.u32 %v914, 7
        %v916 = vsub.s32 %v604, %v915
        %v917 = vrot.slane %v847, %v916
        %v918 = vlaneseq
        %v919 = vshrl.u32 %v918, 7
        %v920 = vsub.s32 %v609, %v919
        %v921 = vrot.slane %v850, %v920
        %v922 = vsel %vm614, %v921, %v917
        %v923 = vsel %vm679, %v868, %v859
        %v924 = vsel %vm681, %v877, %v923
        %v925 = vsel %vm683, %v886, %v924
        %v926 = vsel %vm685, %v895, %v925
        %v927 = vsel %vm687, %v904, %v926
        %v928 = vsel %vm689, %v913, %v927
        %v929 = vsel %vm691, %v922, %v928
        %v931 = vsel %vm694, %v929, 0.0
        %932 = vadd.xlane.f32.xlu0 %v931
        %v933 = vpop.xlane.xlu0 %932
        %v950 = vmul.f32 %v262, %v805
        %v951 = vmul.f32 %v263, %v808
        %v952 = vmul.f32 %v264, %v811
        %v953 = vmul.f32 %v265, %v814
        %v954 = vmul.f32 %v266, %v817
        %v955 = vmul.f32 %v267, %v820
        %v956 = vmul.f32 %v268, %v823
        %v957 = vmul.f32 %v269, %v826
        %v958 = vmul.f32 %v270, %v829
        %v959 = vmul.f32 %v271, %v832
        %v960 = vmul.f32 %v272, %v835
        %v961 = vmul.f32 %v273, %v838
        %v962 = vmul.f32 %v274, %v841
        %v963 = vmul.f32 %v275, %v844
        %v964 = vmul.f32 %v276, %v847
        %v965 = vmul.f32 %v277, %v850
        %v966 = vadd.f32 %v950, %v951
        %v967 = vrot.slane %v966, 4
        %v968 = vadd.f32 %v966, %v967
        %v969 = vrot.slane %v968, 2
        %v970 = vadd.f32 %v968, %v969
        %v971 = vrot.slane %v970, 1
        %v972 = vadd.f32 %v970, %v971
        %v973 = vadd.f32 %v952, %v953
        %v974 = vrot.slane %v973, 4
        %v975 = vadd.f32 %v973, %v974
        %v976 = vrot.slane %v975, 2
        %v977 = vadd.f32 %v975, %v976
        %v978 = vrot.slane %v977, 1
        %v979 = vadd.f32 %v977, %v978
        %v980 = vadd.f32 %v954, %v955
        %v981 = vrot.slane %v980, 4
        %v982 = vadd.f32 %v980, %v981
        %v983 = vrot.slane %v982, 2
        %v984 = vadd.f32 %v982, %v983
        %v985 = vrot.slane %v984, 1
        %v986 = vadd.f32 %v984, %v985
        %v987 = vadd.f32 %v956, %v957
        %v988 = vrot.slane %v987, 4
        %v989 = vadd.f32 %v987, %v988
        %v990 = vrot.slane %v989, 2
        %v991 = vadd.f32 %v989, %v990
        %v992 = vrot.slane %v991, 1
        %v993 = vadd.f32 %v991, %v992
        %v994 = vadd.f32 %v958, %v959
        %v995 = vrot.slane %v994, 4
        %v996 = vadd.f32 %v994, %v995
        %v997 = vrot.slane %v996, 2
        %v998 = vadd.f32 %v996, %v997
        %v999 = vrot.slane %v998, 1
        %v1000 = vadd.f32 %v998, %v999
        %v1001 = vadd.f32 %v960, %v961
        %v1002 = vrot.slane %v1001, 4
        %v1003 = vadd.f32 %v1001, %v1002
        %v1004 = vrot.slane %v1003, 2
        %v1005 = vadd.f32 %v1003, %v1004
        %v1006 = vrot.slane %v1005, 1
        %v1007 = vadd.f32 %v1005, %v1006
        %v1008 = vadd.f32 %v962, %v963
        %v1009 = vrot.slane %v1008, 4
        %v1010 = vadd.f32 %v1008, %v1009
        %v1011 = vrot.slane %v1010, 2
        %v1012 = vadd.f32 %v1010, %v1011
        %v1013 = vrot.slane %v1012, 1
        %v1014 = vadd.f32 %v1012, %v1013
        %v1015 = vadd.f32 %v964, %v965
        %v1016 = vrot.slane %v1015, 4
        %v1017 = vadd.f32 %v1015, %v1016
        %v1018 = vrot.slane %v1017, 2
        %v1019 = vadd.f32 %v1017, %v1018
        %v1020 = vrot.slane %v1019, 1
        %v1021 = vadd.f32 %v1019, %v1020
        %v1023 = vrot.slane %v933, 1
        %v1024 = vrot.slane %v933, 2
        %v1025 = vrot.slane %v933, 3
        %v1026 = vrot.slane %v933, 4
        %v1027 = vrot.slane %v933, 5
        %v1028 = vrot.slane %v933, 6
        %v1029 = vrot.slane %v933, 7
        %v1038 = vrcp.pop %v933
        %v1039 = vmul.f32 %v972, %v1038
        %v1040 = vrcp.pop %v1023
        %v1041 = vmul.f32 %v979, %v1040
        %v1042 = vrcp.pop %v1024
        %v1043 = vmul.f32 %v986, %v1042
        %v1044 = vrcp.pop %v1025
        %v1045 = vmul.f32 %v993, %v1044
        %v1046 = vrcp.pop %v1026
        %v1047 = vmul.f32 %v1000, %v1046
        %v1048 = vrcp.pop %v1027
        %v1049 = vmul.f32 %v1007, %v1048
        %v1050 = vrcp.pop %v1028
        %v1051 = vmul.f32 %v1014, %v1050
        %v1052 = vrcp.pop %v1029
        %v1053 = vmul.f32 %v1021, %v1052
        %v1062 = vrot.slane %v1041, 7
        %v1063 = vsel %vm679, %v1062, %v1039
        %v1064 = vrot.slane %v1043, 6
        %v1065 = vsel %vm681, %v1064, %v1063
        %v1066 = vrot.slane %v1045, 5
        %v1067 = vsel %vm683, %v1066, %v1065
        %v1068 = vrot.slane %v1047, 4
        %v1069 = vsel %vm685, %v1068, %v1067
        %v1070 = vrot.slane %v1049, 3
        %v1071 = vsel %vm687, %v1070, %v1069
        %v1072 = vrot.slane %v1051, 2
        %v1073 = vsel %vm689, %v1072, %v1071
        %v1074 = vrot.slane %v1053, 1
        %v1075 = vsel %vm691, %v1074, %v1073
        %1077 = vst [vmem:[%s260] sm:$0xff] %v1075
        %s1078 = sand.u32 %s109, 1
        %s1079 = scalar_lea.sflag [#allocation4], %s1078
        %s1080 = sand.u32 %s109, 1
        %s1081 = smul.addr %s1080, 8
        %s1082 = scalar_lea.vmem [#allocation8], %s1081
        // Predicated region
        $region45: #{tpu_custom_call.1} parent=31 // pred_check
          %p1083 = pneg %p119
        $region46: #{tpu_custom_call.1} parent=31 // pred_check_branch
          %1085 = sbr.rel (%p1083) target = $region48
        $region47: #{tpu_custom_call.1} parent=31 // pred_region
          %s1087 = ssub.s32 128, 128
          %1088 = vsyncadd %s1079, %s1087
          %s1089 = smul.addr %s23, 128
          %s1090 = scalar_lea.hbm %s3, %s1089
          %s1092 = sshll.u32 %s1082, 4
          %s1093 = int_to_ptr.vmem [resolvable:$true] %s1092
          %1095 = dma.vmem_to_hbm [thread:$0]  %s1093, 128, %s1090, %s1079
        $region48: #{tpu_custom_call.1} parent=31 // pred_fallthru
          _
      $region32: #{tpu_custom_call.1} parent=5 // pred_fallthru
        _
      %p1096 = scmp.le.s32.totalorder 2, %s18
      // Predicated region
      $region49: #{tpu_custom_call.1} parent=5 // pred_check
        %p1097 = pneg %p1096
      $region50: #{tpu_custom_call.1} parent=5 // pred_check_branch
        %1099 = sbr.rel (%p1097) target = $region52
      $region51: #{tpu_custom_call.1} parent=5 // pred_region
        %s1100 = ssub.s32 %s18, 2
        // Predicated region
        $region53: #{tpu_custom_call.1} parent=51 // pred_check
          %p1101 = pneg %p125
        $region54: #{tpu_custom_call.1} parent=51 // pred_check_branch
          %1103 = sbr.rel (%p1101) target = $region56
        $region55: #{tpu_custom_call.1} parent=51 // pred_region
          %s1104 = sand.u32 %s110, 1
          %s1105 = scalar_lea.sflag [#allocation4], %s1104
          %s1106 = sand.u32 %s110, 1
          %s1107 = smul.addr %s1106, 8
          %s1108 = scalar_lea.vmem [#allocation8], %s1107
          %1109 = dma.done %s1105, 128
        $region56: #{tpu_custom_call.1} parent=51 // pred_fallthru
          _
      $region52: #{tpu_custom_call.1} parent=5 // pred_fallthru
        _
    $region6: #{tpu_custom_call.1} parent=1 // loop_footer
      %s22 = sadd.s32 1, %s18
    $region7: #{tpu_custom_call.1} parent=1 // loop_footer_branch
      %17 = sbr.rel target = $region3
    $region8: #{tpu_custom_call.1} parent=1 // loop_exit
      _
    %1110 = vsyncpa [#allocation3], 1
    %s1111 = scalar_lea.sflag [#allocation3], 1
    %1112 = vsyncpa %s1111, 1
    %1113 = vsyncpa [#allocation6], 1
    %s1114 = scalar_lea.sflag [#allocation6], 1
    %1115 = vsyncpa %s1114, 1
    %1116 = vsyncpa [#allocation4], 1
    %s1117 = scalar_lea.sflag [#allocation4], 1
    %1118 = vsyncpa %s1117, 1

</llo_original>
